<compile_context>
chip_gen: v6e
topology: v6e:2x2x1
jax: 0.10.0
libtpu: 0.0.40
codegen_flags: <defaults>
</compile_context>

<pallas_src>
import functools

import jax
import jax.numpy as jnp
from jax import lax
from jax.experimental import pallas as pl
from jax.experimental.pallas import tpu as pltpu


def _row_tile_and_vmem(n_rows, vocab, elem_bytes):
    """Pick the row tile from a bytes budget and a per-generation VMEM limit."""
    sub = 16 if elem_bytes < 4 else 8           # sublane multiple (bf16 packs 16)

    # Per-generation VMEM budget: v5e/v6e have 128 MiB physical VMEM per core,
    # v7x has only 64 MiB -> smaller scoped limit there.
    try:
        vmem_phys = int(pltpu.get_tpu_info().vmem_capacity_bytes)
    except Exception:  # pragma: no cover - conservative fallback (v7x-sized)
        vmem_phys = 64 * 1024 * 1024
    if vmem_phys > 96 * 1024 * 1024:            # v5e / v6e class
        vmem_limit = 96 * 1024 * 1024
    else:                                       # v7x class
        vmem_limit = 48 * 1024 * 1024

    # ~8 MiB blocks: double-buffered x is 16 MiB, leaving headroom for the
    # compare/select temporaries while keeping per-step overhead a few percent.
    target_bytes = 8 * 1024 * 1024

    rt = target_bytes // max(1, vocab * elem_bytes)   # cap on BYTES, not rows
    rt = max(sub, (rt // sub) * sub)

    # Don't exceed the (rounded-up) total row count.
    n_up = ((n_rows + sub - 1) // sub) * sub
    rt = min(rt, n_up)

    # Keep >= ~8 grid steps when the problem is big enough: feeds both v7x
    # TensorCores on the "parallel" axis and deepens the DMA pipeline overlap.
    if n_rows >= 8 * sub:
        rt = min(rt, max(sub, (n_rows // (8 * sub)) * sub))

    return max(rt, sub), vmem_limit


def _lm_criterion_kernel(x_ref, tm_ref, out_ref, *, n_rows, row_tile):
    """One grid step: per-block partial sums of -gathered*mask and of mask.

    x_ref   : (row_tile, V)  log-probs (native dtype; NOT upcast tile-wide)
    tm_ref  : (row_tile, 2)  f32: col 0 = target index, col 1 = mask
    out_ref : (1, 1, 2)      f32: [partial numerator, partial denominator]
    """
    i = pl.program_id(0)

    x = x_ref[...]                                   # (TN, V) native dtype
    tm = tm_ref[...]                                 # (TN, 2) f32
    tgt = tm[:, 0:1].astype(jnp.int32)               # (TN, 1) exact for V < 2^24
    msk = tm[:, 1:2]                                 # (TN, 1) f32

    # Tail-row validity: the last block may extend past n_rows (no wrapper pad);
    # out-of-bounds rows hold unspecified data and must contribute nothing.
    row = i * row_tile + lax.broadcasted_iota(jnp.int32, (row_tile, 1), 0)
    valid = row < n_rows                             # (TN, 1) bool

    # Gather x[r, tgt[r]]: compare-select in the native dtype (exactly one
    # non-zero per row -> the lane sum is exact even in bf16), then upcast only
    # the (TN, 1) result.  `col` is grid-invariant, so Mosaic can hoist it.
    col = lax.broadcasted_iota(jnp.int32, x.shape, 1)
    gathered = jnp.sum(
        jnp.where(col == tgt, x, jnp.zeros([], x.dtype)),
        axis=1, keepdims=True,
    ).astype(jnp.float32)                            # (TN, 1) f32

    m_eff = jnp.where(valid, msk, 0.0)               # zero mask on tail rows
    g_eff = jnp.where(valid, gathered, 0.0)          # select, so NaN cannot leak

    num = jnp.sum(-g_eff * m_eff)                    # scalar f32
    den = jnp.sum(m_eff)                             # scalar f32

    lane = lax.broadcasted_iota(jnp.int32, (1, 1, 2), 2)
    out_ref[...] = jnp.where(lane == 0, num, den)    # pack both into one store


@jax.jit
def language_model_criterion(inp, target, mask):
    """Pallas implementation of LanguageModelCriterion.forward.

    inp    : (B, T, V) float32 or bfloat16 log-probs
    target : (B, T_full) integer targets (T_full >= T; sliced to T)
    mask   : (B, T_full) mask (sliced to T)
    returns: scalar float32 loss
    """
    B, T, V = inp.shape
    target = target[:, :T]
    mask = mask[:, :T]
    n = B * T

    # Reshapes only (no pad, no dtype change of the big tensor).
    x = inp.reshape(n, V)
    # Pack target + mask into a single (n, 2) f32 side input -> one small DMA
    # per grid step instead of two (targets are exact in f32 for V < 2^24).
    tm = jnp.stack(
        [target.reshape(n).astype(jnp.float32),
         mask.reshape(n).astype(jnp.float32)],
        axis=1,
    )

    elem = jnp.dtype(x.dtype).itemsize
    row_tile, vmem_limit = _row_tile_and_vmem(n, V, elem)
    nblocks = pl.cdiv(n, row_tile)

    kern = functools.partial(_lm_criterion_kernel, n_rows=n, row_tile=row_tile)

    parts = pl.pallas_call(
        kern,
        out_shape=jax.ShapeDtypeStruct((nblocks, 1, 2), jnp.float32),
        grid_spec=pltpu.PrefetchScalarGridSpec(
            num_scalar_prefetch=0,
            grid=(nblocks,),
            in_specs=[
                pl.BlockSpec((row_tile, V), lambda i: (i, 0)),
                pl.BlockSpec((row_tile, 2), lambda i: (i, 0)),
            ],
            out_specs=pl.BlockSpec((1, 1, 2), lambda i: (i, 0, 0)),
        ),
        compiler_params=pltpu.CompilerParams(
            # Each block writes its own partial -> the row loop can be sharded
            # across both TensorCores on v7x; neutral on v5e/v6e.
            dimension_semantics=("parallel",),
            # Per-generation scoped-VMEM budget (see _row_tile_and_vmem).
            vmem_limit_bytes=vmem_limit,
        ),
        cost_estimate=pl.CostEstimate(
            flops=3 * n * V,
            transcendentals=0,
            bytes_accessed=n * V * elem + n * 2 * 4 + nblocks * 2 * 4,
        ),
    )(x, tm)

    sums = jnp.sum(parts, axis=(0, 1))               # (2,) = (num, den)
    return sums[0] / sums[1]


def _reference(inp, target, mask):
    B, T, V = inp.shape
    tgt = target[:, :T].reshape(-1).astype(jnp.int32)
    msk = mask[:, :T].reshape(-1).astype(jnp.float32)
    flat = inp.reshape(-1, V).astype(jnp.float32)
    gathered = jnp.take_along_axis(flat, tgt[:, None], axis=1)[:, 0]
    return jnp.sum(-gathered * msk) / jnp.sum(msk)


if __name__ == "__main__":
    key = jax.random.PRNGKey(0)

    # Primary small case (B=2, T=8, V=32; target/mask longer -> sliced in forward).
    k1, k2 = jax.random.split(key)
    B, T, T_full, V = 2, 8, 10, 32
    logits = jax.random.normal(k1, (B, T, V), dtype=jnp.float32)
    logprobs = jax.nn.log_softmax(logits, axis=-1)
    target = jax.random.randint(k2, (B, T_full), 0, V, dtype=jnp.int32)
    lengths = jnp.array([7, 5], dtype=jnp.int32)
    mask = (jnp.arange(T_full)[None, :] < lengths[:, None]).astype(jnp.float32)

    out = jax.block_until_ready(language_model_criterion(logprobs, target, mask))
    ref = _reference(logprobs, target, mask)
    assert jnp.allclose(out, ref, rtol=1e-5, atol=1e-5), (out, ref)

    # Secondary case: multi-block grid, in-kernel tail-row masking, bf16 log-probs.
    k3, k4, k5 = jax.random.split(key, 3)
    B2, T2, Tf2, V2 = 8, 130, 132, 64
    logits2 = jax.random.normal(k3, (B2, T2, V2), dtype=jnp.float32)
    logprobs2 = jax.nn.log_softmax(logits2, axis=-1).astype(jnp.bfloat16)
    target2 = jax.random.randint(k4, (B2, Tf2), 0, V2, dtype=jnp.int32)
    lengths2 = jax.random.randint(k5, (B2,), 1, T2 + 1, dtype=jnp.int32)
    mask2 = (jnp.arange(Tf2)[None, :] < lengths2[:, None]).astype(jnp.float32)

    out2 = jax.block_until_ready(language_model_criterion(logprobs2, target2, mask2))
    ref2 = _reference(logprobs2, target2, mask2)
    assert jnp.allclose(out2, ref2, rtol=1e-4, atol=1e-4), (out2, ref2)

    print("KERNEL_OK")
</pallas_src>

<mosaic_0001>
module attributes {stable_mosaic.version = 11 : i64} {
  func.func @_lm_criterion_kernel(%arg0: i32, %arg1: memref<16x32xf32, #tpu.memory_space<vmem>>, %arg2: memref<16x2xf32, #tpu.memory_space<vmem>>, %arg3: memref<1x1x2xf32, #tpu.memory_space<vmem>>) attributes {dimension_semantics = [#tpu.dimension_semantics<parallel>], iteration_bounds = array<i64: 1>, scalar_prefetch = 0 : i64, scratch_operands = 0 : i64, tpu.core_type = #tpu.core_type<tc>, window_params = [{transform_indices = @transform_0, window_bounds = array<i64: 16, 32>}, {transform_indices = @transform_1, window_bounds = array<i64: 16, 2>}, {transform_indices = @transform_2, window_bounds = array<i64: 1, 1, 2>}]} {
    %c0 = arith.constant 0 : index
    %c0_0 = arith.constant 0 : index
    %0 = vector.load %arg1[%c0, %c0_0] : memref<16x32xf32, #tpu.memory_space<vmem>>, vector<16x32xf32>
    %c0_1 = arith.constant 0 : index
    %c0_2 = arith.constant 0 : index
    %1 = vector.load %arg2[%c0_1, %c0_2] : memref<16x2xf32, #tpu.memory_space<vmem>>, vector<16x2xf32>
    %2 = vector.extract_strided_slice %1 {offsets = [0, 0], sizes = [16, 1], strides = [1, 1]} : vector<16x2xf32> to vector<16x1xf32>
    %3 = arith.fptosi %2 : vector<16x1xf32> to vector<16x1xi32>
    %4 = vector.extract_strided_slice %1 {offsets = [0, 1], sizes = [16, 1], strides = [1, 1]} : vector<16x2xf32> to vector<16x1xf32>
    %c16_i32 = arith.constant 16 : i32
    %5 = arith.muli %arg0, %c16_i32 : i32
    %6 = tpu.iota {dimensions = array<i32: 0>} : vector<16x1xi32>
    %7 = vector.broadcast %5 : i32 to vector<16x1xi32>
    %8 = arith.addi %7, %6 : vector<16x1xi32>
    %c16_i32_3 = arith.constant 16 : i32
    %9 = vector.broadcast %c16_i32_3 : i32 to vector<16x1xi32>
    %10 = arith.cmpi slt, %8, %9 : vector<16x1xi32>
    %11 = tpu.iota {dimensions = array<i32: 1>} : vector<16x32xi32>
    %12 = vector.broadcast %3 : vector<16x1xi32> to vector<16x32xi32>
    %13 = arith.cmpi eq, %11, %12 : vector<16x32xi32>
    %cst = arith.constant 0.000000e+00 : f32
    %14 = vector.broadcast %cst : f32 to vector<16x32xf32>
    %15 = arith.select %13, %0, %14 : vector<16x32xi1>, vector<16x32xf32>
    %cst_4 = arith.constant dense<0.000000e+00> : vector<16xf32>
    %16 = vector.multi_reduction <add>, %15, %cst_4 [1] : vector<16x32xf32> to vector<16xf32>
    %17 = vector.shape_cast %16 : vector<16xf32> to vector<16x1xf32>
    %cst_5 = arith.constant 0.000000e+00 : f32
    %18 = vector.broadcast %cst_5 : f32 to vector<16x1xf32>
    %19 = arith.select %10, %4, %18 : vector<16x1xi1>, vector<16x1xf32>
    %cst_6 = arith.constant 0.000000e+00 : f32
    %20 = vector.broadcast %cst_6 : f32 to vector<16x1xf32>
    %21 = arith.select %10, %17, %20 : vector<16x1xi1>, vector<16x1xf32>
    %cst_7 = arith.constant 0.000000e+00 : f32
    %22 = vector.broadcast %cst_7 : f32 to vector<16x1xf32>
    %23 = arith.subf %22, %21 : vector<16x1xf32>
    %24 = arith.mulf %23, %19 : vector<16x1xf32>
    %25 = vector.shape_cast %24 : vector<16x1xf32> to vector<1x16x1xf32>
    %cst_8 = arith.constant dense<0.000000e+00> : vector<1xf32>
    %26 = vector.multi_reduction <add>, %25, %cst_8 [1, 2] : vector<1x16x1xf32> to vector<1xf32>
    %27 = vector.shape_cast %26 : vector<1xf32> to vector<1x1x1xf32>
    %28 = vector.extract %27[0, 0, 0] : f32 from vector<1x1x1xf32>
    %29 = vector.shape_cast %19 : vector<16x1xf32> to vector<1x16x1xf32>
    %cst_9 = arith.constant dense<0.000000e+00> : vector<1xf32>
    %30 = vector.multi_reduction <add>, %29, %cst_9 [1, 2] : vector<1x16x1xf32> to vector<1xf32>
    %31 = vector.shape_cast %30 : vector<1xf32> to vector<1x1x1xf32>
    %32 = vector.extract %31[0, 0, 0] : f32 from vector<1x1x1xf32>
    %33 = tpu.iota {dimensions = array<i32: 2>} : vector<1x1x2xi32>
    %c0_i32 = arith.constant 0 : i32
    %34 = vector.broadcast %c0_i32 : i32 to vector<1x1x2xi32>
    %35 = arith.cmpi eq, %33, %34 : vector<1x1x2xi32>
    %36 = vector.broadcast %28 : f32 to vector<1x1x2xf32>
    %37 = vector.broadcast %32 : f32 to vector<1x1x2xf32>
    %38 = arith.select %35, %36, %37 : vector<1x1x2xi1>, vector<1x1x2xf32>
    %c0_10 = arith.constant 0 : index
    %c0_11 = arith.constant 0 : index
    %c0_12 = arith.constant 0 : index
    %39 = vector.load %arg3[%c0_10, %c0_11, %c0_12] : memref<1x1x2xf32, #tpu.memory_space<vmem>>, vector<1x1x2xf32>
    tpu.vector_store %arg3[%c0_10, %c0_11, %c0_12], %38 {strides = array<i32>} : memref<1x1x2xf32, #tpu.memory_space<vmem>>, vector<1x1x2xf32>,
    return
  }
  func.func @transform_0(%arg0: i32) -> (i32, i32) {
    %c0_i32 = arith.constant 0 : i32
    %c0_i32_0 = arith.constant 0 : i32
    return %arg0, %c0_i32 : i32, i32
  }
  func.func @transform_1(%arg0: i32) -> (i32, i32) {
    %c0_i32 = arith.constant 0 : i32
    %c0_i32_0 = arith.constant 0 : i32
    return %arg0, %c0_i32 : i32, i32
  }
  func.func @transform_2(%arg0: i32) -> (i32, i32, i32) {
    %c0_i32 = arith.constant 0 : i32
    %c0_i32_0 = arith.constant 0 : i32
    %c0_i32_1 = arith.constant 0 : i32
    return %arg0, %c0_i32, %c0_i32_0 : i32, i32, i32
  }
}

</mosaic_0001>

<llo_original>
// kernel: language_model_criterion.1
$region0: #{language_model_criterion.1}
  #allocation0 [shape = 'u32[]', space=smem, size = 0x4, offset = 0x4, fixed_abs, tag = 'smem constant byte address 0x4 - core index']
  #allocation1 [shape = 'u32[144,128]{1,0:T(1,128)}', space=vmem, size = 0x12000, scoped, tag = 'internal scratch']
  %s0 = inlined_call_operand.vmem [shape: f32[16,32], index: 0, kind: input, shape index: {}]
  %s1 = inlined_call_operand.vmem [shape: f32[16,2], index: 1, kind: input, shape index: {}]
  %s2 = inlined_call_operand.vmem [shape: f32[1,1,2], index: 2, kind: output, shape index: {}]
  %s3 = sld [smem:[#allocation0]]
  $region18: #{language_model_criterion.1} parent=0
    _
  %s5 = ssub.s32 1, %s3
  %s6 = scalar_select 0, %s5, %s3
  // Predicated region
  $region2: #{language_model_criterion.1} parent=0 // pred_check
    _
  $region3: #{language_model_criterion.1} parent=0 // pred_check_branch
    %8 = sbr.rel (0) target = $region5
  $region4: #{language_model_criterion.1} parent=0 // pred_region
    _
  $region5: #{language_model_criterion.1} parent=0 // pred_fallthru
    _
  // Predicated region
  $region6: #{language_model_criterion.1} parent=0 // pred_check
    _
  $region7: #{language_model_criterion.1} parent=0 // pred_check_branch
    %10 = sbr.rel (0) target = $region9
  $region8: #{language_model_criterion.1} parent=0 // pred_region
    _
  $region9: #{language_model_criterion.1} parent=0 // pred_fallthru
    _
  %v11 = vld [vmem:[%s0] sm:$0xff]
  %v12 = vld [vmem:[%s0 + $0x8] sm:$0xff]
  %v13 = vld [vmem:[%s1] sm:$0xff]
  %v14 = vld [vmem:[%s1 + $0x8] sm:$0xff]
  %v15 = vcvt.f32.s32.to.zero.pseudo %v13
  %v16 = vcvt.f32.s32.to.zero.pseudo %v14
  %s17 = smul.u32 0, 16
  %v18 = vlaneseq
  %v19 = vshrl.u32 %v18, 7
  %v20 = vadd.s32 %v19, 8
  %v21 = vstv %s17
  %v22 = vadd.s32 %v21, %v19
  %v23 = vadd.s32 %v21, %v20
  %vm24 = vcmp.lt.s32.totalorder %v22, 16
  %vm25 = vcmp.lt.s32.totalorder %v23, 16
  %v26 = vlaneseq
  %v27 = vand.u32 %v26, 127
  %28 = vset.pattern.permute.xlu0 0
  %29 = vperm.xlu0 %28, %v15
  %v30 = vpop.permute.xlu0 %29
  %31 = vset.pattern.permute.xlu0 0
  %32 = vperm.xlu0 %31, %v16
  %v33 = vpop.permute.xlu0 %32
  %vm34 = vcmp.eq.s32.totalorder %v27, %v30
  %vm35 = vcmp.eq.s32.totalorder %v27, %v33
  %v36 = vsel %vm34, %v11, 0.0
  %v37 = vsel %vm35, %v12, 0.0
  %vm38 = vcmask 261120
  %v39 = vsel %vm38, %v36, 0.0
  %40 = vadd.xlane.f32.xlu0 %v39
  %v41 = vpop.xlane.xlu0 %40
  %v42 = vsel %vm38, %v37, 0.0
  %43 = vadd.xlane.f32.xlu0 %v42
  %v44 = vpop.xlane.xlu0 %43
  %v45 = vsel %vm24, %v13, 0.0
  %v46 = vsel %vm25, %v14, 0.0
  %v47 = vsel %vm24, %v41, 0.0
  %v48 = vsel %vm25, %v44, 0.0
  %v49 = vsub.f32 0.0, %v47
  %v50 = vsub.f32 0.0, %v48
  %v51 = vmul.f32 %v49, %v45
  %v52 = vmul.f32 %v50, %v46
  %55 = vrot.lane.b32.xlu0 %v51, 127
  %v56 = vpop.permute.xlu0 %55
  %57 = vrot.lane.b32.xlu0 %v52, 127
  %v58 = vpop.permute.xlu0 %57
  %vm61 = vcmask 7168
  %v62 = vsel %vm61, %v56, 0.0
  %v63 = vsel %vm61, %v58, 0.0
  %v64 = vadd.f32 %v62, %v63
  %65 = vadd.xlane.f32.xlu0 %v64
  %v66 = vpop.xlane.xlu0 %65
  %v67 = vrot.slane %v66, 4
  %v68 = vadd.f32 %v66, %v67
  %v69 = vrot.slane %v68, 2
  %v70 = vadd.f32 %v68, %v69
  %v71 = vrot.slane %v70, 1
  %v72 = vadd.f32 %v70, %v71
  %s73 = vtos %v72
  %76 = vrot.lane.b32.xlu0 %v45, 127
  %v77 = vpop.permute.xlu0 %76
  %78 = vrot.lane.b32.xlu0 %v46, 127
  %v79 = vpop.permute.xlu0 %78
  %v82 = vsel %vm61, %v77, 0.0
  %v83 = vsel %vm61, %v79, 0.0
  %v84 = vadd.f32 %v82, %v83
  %85 = vadd.xlane.f32.xlu0 %v84
  %v86 = vpop.xlane.xlu0 %85
  %v87 = vrot.slane %v86, 4
  %v88 = vadd.f32 %v86, %v87
  %v89 = vrot.slane %v88, 2
  %v90 = vadd.f32 %v88, %v89
  %v91 = vrot.slane %v90, 1
  %v92 = vadd.f32 %v90, %v91
  %s93 = vtos %v92
  %vm94 = vcmp.eq.s32.totalorder %v27, 0
  %v95 = vstv %s73
  %v96 = vstv %s93
  %v97 = vsel %vm94, %v95, %v96
  %vm98 = vcmask 8192
  %99 = vst.msk [vmem:[%s2] sm:$0x1] %vm98, %v97
  // Predicated region
  $region10: #{language_model_criterion.1} parent=0 // pred_check
    _
  $region11: #{language_model_criterion.1} parent=0 // pred_check_branch
    %101 = sbr.rel (0) target = $region13
  $region12: #{language_model_criterion.1} parent=0 // pred_region
    _
  $region13: #{language_model_criterion.1} parent=0 // pred_fallthru
    _
  // Predicated region
  $region14: #{language_model_criterion.1} parent=0 // pred_check
    _
  $region15: #{language_model_criterion.1} parent=0 // pred_check_branch
    %103 = sbr.rel (0) target = $region17
  $region16: #{language_model_criterion.1} parent=0 // pred_region
    _
  $region17: #{language_model_criterion.1} parent=0 // pred_fallthru
    _

</llo_original>
